<compile_context>
chip_gen: v7x
topology: tpu7x:2x2x1
jax: 0.10.0
libtpu: 0.0.40
codegen_flags: <defaults>
</compile_context>

<pallas_src>
import jax
import jax.numpy as jnp
from jax.experimental import pallas as pl
from jax.experimental.pallas import tpu as pltpu

IN_FEATURES = 15
NUM_CLASSES = 4
MAX_TILE = 32768  # rows; ~3 MiB VMEM double-buffered -> fits every generation


def _mlp_kernel(x_ref, w1_ref, b1_ref, w2_ref, b2_ref, w3_ref, b3_ref, o_ref):
    # fc1 + sigmoid: cast x to bf16 in-kernel (no wrapper pass), fp32 accum.
    x = x_ref[...].astype(jnp.bfloat16)                       # (tb, 15)
    h1 = jnp.dot(x, w1_ref[...], preferred_element_type=jnp.float32)
    h1 = jax.nn.sigmoid(h1 + b1_ref[...])
    # fc2 + sigmoid
    h2 = jnp.dot(h1.astype(jnp.bfloat16), w2_ref[...],
                 preferred_element_type=jnp.float32)
    h2 = jax.nn.sigmoid(h2 + b2_ref[...])
    # fc3 + log_softmax over the last dim (matches nn.LogSoftmax on 2-D input)
    logits = jnp.dot(h2.astype(jnp.bfloat16), w3_ref[...],
                     preferred_element_type=jnp.float32)
    logits = logits + b3_ref[...]
    m = jnp.max(logits, axis=-1, keepdims=True)
    shifted = logits - m
    lse = jnp.log(jnp.sum(jnp.exp(shifted), axis=-1, keepdims=True))
    o_ref[...] = (shifted - lse).astype(o_ref.dtype)


def _round_up(n, m):
    return ((n + m - 1) // m) * m


@jax.jit
def net_forward(x, w1, b1, w2, b2, w3, b3):
    batch, in_dim = x.shape
    hidden = w1.shape[1]
    out_dim = w3.shape[1]

    # Batch tile: ~cdiv(batch, 4) rows (>= 4 grid steps at large batch so
    # both v7x TensorCores get >= 2 pipelined steps), rounded up to the
    # sublane multiple of 8, capped at 32768 rows.
    tb = max(8, min(MAX_TILE, _round_up(pl.cdiv(batch, 4), 8)))
    grid = (pl.cdiv(batch, tb),)

    flops = 2 * batch * (in_dim * hidden + hidden * hidden + hidden * out_dim)
    transcendentals = batch * (2 * hidden + out_dim + 1)
    bytes_accessed = (
        batch * in_dim * 4                                            # x (f32)
        + (in_dim * hidden + hidden * hidden + hidden * out_dim) * 2  # W (bf16)
        + (2 * hidden + out_dim) * 4                                  # b (f32)
        + batch * out_dim * 4                                         # out (f32)
    )

    return pl.pallas_call(
        _mlp_kernel,
        out_shape=jax.ShapeDtypeStruct((batch, out_dim), jnp.float32),
        grid=grid,
        in_specs=[
            pl.BlockSpec((tb, in_dim), lambda i: (i, 0)),       # x (batch-tiled)
            pl.BlockSpec((in_dim, hidden), lambda i: (0, 0)),   # w1 (resident)
            pl.BlockSpec((1, hidden), lambda i: (0, 0)),        # b1 (resident)
            pl.BlockSpec((hidden, hidden), lambda i: (0, 0)),   # w2 (resident)
            pl.BlockSpec((1, hidden), lambda i: (0, 0)),        # b2 (resident)
            pl.BlockSpec((hidden, out_dim), lambda i: (0, 0)),  # w3 (resident)
            pl.BlockSpec((1, out_dim), lambda i: (0, 0)),       # b3 (resident)
        ],
        out_specs=pl.BlockSpec((tb, out_dim), lambda i: (i, 0)),
        compiler_params=pltpu.CompilerParams(
            dimension_semantics=("parallel",)),
        cost_estimate=pl.CostEstimate(
            flops=flops,
            transcendentals=transcendentals,
            bytes_accessed=bytes_accessed),
    )(x, w1, b1, w2, b2, w3, b3)


def xavier_normal(key, out_features, in_features):
    # PyTorch nn.init.xavier_normal_ on weight of shape (out, in).
    std = (2.0 / (in_features + out_features)) ** 0.5
    w_torch_layout = std * jax.random.normal(
        key, (out_features, in_features), dtype=jnp.float32)
    return w_torch_layout.T  # store as (in, out) for x @ W


def linear_bias(key, in_features, out_features):
    # PyTorch nn.Linear default bias init: U(-1/sqrt(fan_in), 1/sqrt(fan_in)).
    bound = 1.0 / (in_features ** 0.5)
    return jax.random.uniform(key, (1, out_features), dtype=jnp.float32,
                              minval=-bound, maxval=bound)


def init_params(key, neurons=8):
    ks = jax.random.split(key, 6)
    w1 = xavier_normal(ks[0], neurons, IN_FEATURES)              # (15, H)
    b1 = linear_bias(ks[1], IN_FEATURES, neurons)
    w2 = xavier_normal(ks[2], neurons, neurons)                  # (H, H)
    b2 = linear_bias(ks[3], neurons, neurons)
    w3 = xavier_normal(ks[4], NUM_CLASSES, neurons)              # (H, 4)
    b3 = linear_bias(ks[5], neurons, NUM_CLASSES)
    # Weights bf16 for the MXU (fp32 accumulation in-kernel); biases fp32.
    return (w1.astype(jnp.bfloat16), b1,
            w2.astype(jnp.bfloat16), b2,
            w3.astype(jnp.bfloat16), b3)


def ref_forward(x, params):
    # Pure-JAX reference mirroring the kernel's bf16-input / fp32-accum math.
    w1, b1, w2, b2, w3, b3 = params
    h1 = jax.nn.sigmoid(
        jnp.dot(x.astype(jnp.bfloat16), w1,
                preferred_element_type=jnp.float32) + b1)
    h2 = jax.nn.sigmoid(
        jnp.dot(h1.astype(jnp.bfloat16), w2,
                preferred_element_type=jnp.float32) + b2)
    logits = jnp.dot(h2.astype(jnp.bfloat16), w3,
                     preferred_element_type=jnp.float32) + b3
    return jax.nn.log_softmax(logits, axis=-1)


if __name__ == "__main__":
    key = jax.random.PRNGKey(0)
    k_x, k_x2, k_p = jax.random.split(key, 3)

    neurons = 8
    params = init_params(k_p, neurons=neurons)

    # Small demo batch (single grid step).
    x_small = jax.random.normal(k_x, (8, IN_FEATURES), dtype=jnp.float32)
    out_small = jax.block_until_ready(net_forward(x_small, *params))
    ref_small = ref_forward(x_small, params)
    assert out_small.shape == (8, NUM_CLASSES)
    assert bool(jnp.allclose(out_small, ref_small, atol=1e-2, rtol=1e-2))

    # Batch that is not a multiple of the tile: exercises the multi-step grid
    # and the partial last block (no explicit padding / output slice anywhere).
    x_big = jax.random.normal(k_x2, (100, IN_FEATURES), dtype=jnp.float32)
    out_big = jax.block_until_ready(net_forward(x_big, *params))
    ref_big = ref_forward(x_big, params)
    assert out_big.shape == (100, NUM_CLASSES)
    assert bool(jnp.allclose(out_big, ref_big, atol=1e-2, rtol=1e-2))
    assert bool(jnp.all(jnp.isfinite(out_big)))

    print("KERNEL_OK")
</pallas_src>

<mosaic_0001>
module attributes {stable_mosaic.version = 11 : i64} {
  func.func @_mlp_kernel(%arg0: i32, %arg1: memref<8x15xf32, #tpu.memory_space<vmem>>, %arg2: memref<15x8xbf16, #tpu.memory_space<vmem>>, %arg3: memref<1x8xf32, #tpu.memory_space<vmem>>, %arg4: memref<8x8xbf16, #tpu.memory_space<vmem>>, %arg5: memref<1x8xf32, #tpu.memory_space<vmem>>, %arg6: memref<8x4xbf16, #tpu.memory_space<vmem>>, %arg7: memref<1x4xf32, #tpu.memory_space<vmem>>, %arg8: memref<8x4xf32, #tpu.memory_space<vmem>>) attributes {dimension_semantics = [#tpu.dimension_semantics<parallel>], iteration_bounds = array<i64: 1>, scalar_prefetch = 0 : i64, scratch_operands = 0 : i64, tpu.core_type = #tpu.core_type<tc>, window_params = [{transform_indices = @transform_0, window_bounds = array<i64: 8, 15>}, {pipeline_mode = #tpu.pipeline_mode<synchronous>, transform_indices = @transform_1, window_bounds = array<i64: 15, 8>}, {pipeline_mode = #tpu.pipeline_mode<synchronous>, transform_indices = @transform_2, window_bounds = array<i64: 1, 8>}, {pipeline_mode = #tpu.pipeline_mode<synchronous>, transform_indices = @transform_3, window_bounds = array<i64: 8, 8>}, {pipeline_mode = #tpu.pipeline_mode<synchronous>, transform_indices = @transform_4, window_bounds = array<i64: 1, 8>}, {pipeline_mode = #tpu.pipeline_mode<synchronous>, transform_indices = @transform_5, window_bounds = array<i64: 8, 4>}, {pipeline_mode = #tpu.pipeline_mode<synchronous>, transform_indices = @transform_6, window_bounds = array<i64: 1, 4>}, {transform_indices = @transform_7, window_bounds = array<i64: 8, 4>}]} {
    %c0 = arith.constant 0 : index
    %c0_0 = arith.constant 0 : index
    %0 = vector.load %arg1[%c0, %c0_0] : memref<8x15xf32, #tpu.memory_space<vmem>>, vector<8x15xf32>
    %1 = arith.truncf %0 : vector<8x15xf32> to vector<8x15xbf16>
    %c0_1 = arith.constant 0 : index
    %c0_2 = arith.constant 0 : index
    %2 = vector.load %arg2[%c0_1, %c0_2] : memref<15x8xbf16, #tpu.memory_space<vmem>>, vector<15x8xbf16>
    %cst = arith.constant dense<0.000000e+00> : vector<8x8xf32>
    %3 = tpu.matmul %1, %2, %cst {dimension_numbers = #tpu.dot_dimension_numbers<[1], [0], [0], [1], [0, 0, 1, 1], [], []>} : vector<8x15xbf16>, vector<15x8xbf16>, vector<8x8xf32> -> vector<8x8xf32>
    %c0_3 = arith.constant 0 : index
    %c0_4 = arith.constant 0 : index
    %4 = vector.load %arg3[%c0_3, %c0_4] : memref<1x8xf32, #tpu.memory_space<vmem>>, vector<1x8xf32>
    %5 = vector.broadcast %4 : vector<1x8xf32> to vector<8x8xf32>
    %6 = arith.addf %3, %5 : vector<8x8xf32>
    %7 = arith.negf %6 : vector<8x8xf32>
    %8 = math.exp %7 : vector<8x8xf32>
    %cst_5 = arith.constant 1.000000e+00 : f32
    %9 = vector.broadcast %cst_5 : f32 to vector<8x8xf32>
    %10 = arith.addf %9, %8 : vector<8x8xf32>
    %11 = arith.divf %9, %10 : vector<8x8xf32>
    %12 = arith.truncf %11 : vector<8x8xf32> to vector<8x8xbf16>
    %c0_6 = arith.constant 0 : index
    %c0_7 = arith.constant 0 : index
    %13 = vector.load %arg4[%c0_6, %c0_7] : memref<8x8xbf16, #tpu.memory_space<vmem>>, vector<8x8xbf16>
    %cst_8 = arith.constant dense<0.000000e+00> : vector<8x8xf32>
    %14 = tpu.matmul %12, %13, %cst_8 {dimension_numbers = #tpu.dot_dimension_numbers<[1], [0], [0], [1], [0, 0, 1, 1], [], []>} : vector<8x8xbf16>, vector<8x8xbf16>, vector<8x8xf32> -> vector<8x8xf32>
    %c0_9 = arith.constant 0 : index
    %c0_10 = arith.constant 0 : index
    %15 = vector.load %arg5[%c0_9, %c0_10] : memref<1x8xf32, #tpu.memory_space<vmem>>, vector<1x8xf32>
    %16 = vector.broadcast %15 : vector<1x8xf32> to vector<8x8xf32>
    %17 = arith.addf %14, %16 : vector<8x8xf32>
    %18 = arith.negf %17 : vector<8x8xf32>
    %19 = math.exp %18 : vector<8x8xf32>
    %cst_11 = arith.constant 1.000000e+00 : f32
    %20 = vector.broadcast %cst_11 : f32 to vector<8x8xf32>
    %21 = arith.addf %20, %19 : vector<8x8xf32>
    %22 = arith.divf %20, %21 : vector<8x8xf32>
    %23 = arith.truncf %22 : vector<8x8xf32> to vector<8x8xbf16>
    %c0_12 = arith.constant 0 : index
    %c0_13 = arith.constant 0 : index
    %24 = vector.load %arg6[%c0_12, %c0_13] : memref<8x4xbf16, #tpu.memory_space<vmem>>, vector<8x4xbf16>
    %cst_14 = arith.constant dense<0.000000e+00> : vector<8x4xf32>
    %25 = tpu.matmul %23, %24, %cst_14 {dimension_numbers = #tpu.dot_dimension_numbers<[1], [0], [0], [1], [0, 0, 1, 1], [], []>} : vector<8x8xbf16>, vector<8x4xbf16>, vector<8x4xf32> -> vector<8x4xf32>
    %c0_15 = arith.constant 0 : index
    %c0_16 = arith.constant 0 : index
    %26 = vector.load %arg7[%c0_15, %c0_16] : memref<1x4xf32, #tpu.memory_space<vmem>>, vector<1x4xf32>
    %27 = vector.broadcast %26 : vector<1x4xf32> to vector<8x4xf32>
    %28 = arith.addf %25, %27 : vector<8x4xf32>
    %cst_17 = arith.constant dense<0xFF800000> : vector<8xf32>
    %29 = vector.multi_reduction <maximumf>, %28, %cst_17 [1] : vector<8x4xf32> to vector<8xf32>
    %30 = vector.shape_cast %29 : vector<8xf32> to vector<8x1xf32>
    %31 = vector.broadcast %30 : vector<8x1xf32> to vector<8x4xf32>
    %32 = arith.subf %28, %31 : vector<8x4xf32>
    %33 = math.exp %32 : vector<8x4xf32>
    %cst_18 = arith.constant dense<0.000000e+00> : vector<8xf32>
    %34 = vector.multi_reduction <add>, %33, %cst_18 [1] : vector<8x4xf32> to vector<8xf32>
    %35 = vector.shape_cast %34 : vector<8xf32> to vector<8x1xf32>
    %36 = math.log %35 : vector<8x1xf32>
    %37 = vector.broadcast %36 : vector<8x1xf32> to vector<8x4xf32>
    %38 = arith.subf %32, %37 : vector<8x4xf32>
    %c0_19 = arith.constant 0 : index
    %c0_20 = arith.constant 0 : index
    %39 = vector.load %arg8[%c0_19, %c0_20] : memref<8x4xf32, #tpu.memory_space<vmem>>, vector<8x4xf32>
    tpu.vector_store %arg8[%c0_19, %c0_20], %38 {strides = array<i32>} : memref<8x4xf32, #tpu.memory_space<vmem>>, vector<8x4xf32>,
    return
  }
  func.func @transform_0(%arg0: i32) -> (i32, i32) {
    %c0_i32 = arith.constant 0 : i32
    %c0_i32_0 = arith.constant 0 : i32
    return %arg0, %c0_i32 : i32, i32
  }
  func.func @transform_1(%arg0: i32) -> (i32, i32) {
    %c0_i32 = arith.constant 0 : i32
    %c0_i32_0 = arith.constant 0 : i32
    %c0_i32_1 = arith.constant 0 : i32
    return %c0_i32, %c0_i32_0 : i32, i32
  }
  func.func @transform_2(%arg0: i32) -> (i32, i32) {
    %c0_i32 = arith.constant 0 : i32
    %c0_i32_0 = arith.constant 0 : i32
    %c0_i32_1 = arith.constant 0 : i32
    return %c0_i32, %c0_i32_0 : i32, i32
  }
  func.func @transform_3(%arg0: i32) -> (i32, i32) {
    %c0_i32 = arith.constant 0 : i32
    %c0_i32_0 = arith.constant 0 : i32
    %c0_i32_1 = arith.constant 0 : i32
    return %c0_i32, %c0_i32_0 : i32, i32
  }
  func.func @transform_4(%arg0: i32) -> (i32, i32) {
    %c0_i32 = arith.constant 0 : i32
    %c0_i32_0 = arith.constant 0 : i32
    %c0_i32_1 = arith.constant 0 : i32
    return %c0_i32, %c0_i32_0 : i32, i32
  }
  func.func @transform_5(%arg0: i32) -> (i32, i32) {
    %c0_i32 = arith.constant 0 : i32
    %c0_i32_0 = arith.constant 0 : i32
    %c0_i32_1 = arith.constant 0 : i32
    return %c0_i32, %c0_i32_0 : i32, i32
  }
  func.func @transform_6(%arg0: i32) -> (i32, i32) {
    %c0_i32 = arith.constant 0 : i32
    %c0_i32_0 = arith.constant 0 : i32
    %c0_i32_1 = arith.constant 0 : i32
    return %c0_i32, %c0_i32_0 : i32, i32
  }
  func.func @transform_7(%arg0: i32) -> (i32, i32) {
    %c0_i32 = arith.constant 0 : i32
    %c0_i32_0 = arith.constant 0 : i32
    return %arg0, %c0_i32 : i32, i32
  }
}

</mosaic_0001>

<llo_original>
// kernel: net_forward.1
$region0: #{net_forward.1}
  #allocation0 [shape = 'u32[]', space=smem, size = 0x4, offset = 0x4, fixed_abs, tag = 'smem constant byte address 0x4 - core index']
  #allocation1 [shape = 'u32[144,128]{1,0:T(1,128)}', space=vmem, size = 0x12000, scoped, tag = 'internal scratch']
  %s0 = inlined_call_operand.vmem [shape: f32[8,15], index: 0, kind: input, shape index: {}]
  %s1 = inlined_call_operand.vmem [shape: bf16[15,8], index: 1, kind: input, shape index: {}]
  %s2 = inlined_call_operand.vmem [shape: f32[1,8], index: 2, kind: input, shape index: {}]
  %s3 = inlined_call_operand.vmem [shape: bf16[8,8], index: 3, kind: input, shape index: {}]
  %s4 = inlined_call_operand.vmem [shape: f32[1,8], index: 4, kind: input, shape index: {}]
  %s5 = inlined_call_operand.vmem [shape: bf16[8,4], index: 5, kind: input, shape index: {}]
  %s6 = inlined_call_operand.vmem [shape: f32[1,4], index: 6, kind: input, shape index: {}]
  %s7 = inlined_call_operand.vmem [shape: f32[8,4], index: 7, kind: output, shape index: {}]
  %s8 = sld [smem:[#allocation0]]
  $region38: #{net_forward.1} parent=0
    _
  %s10 = ssub.s32 1, %s8
  %s11 = scalar_select 0, %s10, %s8
  // Predicated region
  $region2: #{net_forward.1} parent=0 // pred_check
    _
  $region3: #{net_forward.1} parent=0 // pred_check_branch
    %13 = sbr.rel (0) target = $region5
  $region4: #{net_forward.1} parent=0 // pred_region
    _
  $region5: #{net_forward.1} parent=0 // pred_fallthru
    _
  // Predicated region
  $region6: #{net_forward.1} parent=0 // pred_check
    _
  $region7: #{net_forward.1} parent=0 // pred_check_branch
    %15 = sbr.rel (0) target = $region9
  $region8: #{net_forward.1} parent=0 // pred_region
    _
  $region9: #{net_forward.1} parent=0 // pred_fallthru
    _
  // Predicated region
  $region10: #{net_forward.1} parent=0 // pred_check
    _
  $region11: #{net_forward.1} parent=0 // pred_check_branch
    %17 = sbr.rel (0) target = $region13
  $region12: #{net_forward.1} parent=0 // pred_region
    _
  $region13: #{net_forward.1} parent=0 // pred_fallthru
    _
  // Predicated region
  $region14: #{net_forward.1} parent=0 // pred_check
    _
  $region15: #{net_forward.1} parent=0 // pred_check_branch
    %19 = sbr.rel (0) target = $region17
  $region16: #{net_forward.1} parent=0 // pred_region
    _
  $region17: #{net_forward.1} parent=0 // pred_fallthru
    _
  // Predicated region
  $region18: #{net_forward.1} parent=0 // pred_check
    _
  $region19: #{net_forward.1} parent=0 // pred_check_branch
    %21 = sbr.rel (0) target = $region21
  $region20: #{net_forward.1} parent=0 // pred_region
    _
  $region21: #{net_forward.1} parent=0 // pred_fallthru
    _
  // Predicated region
  $region22: #{net_forward.1} parent=0 // pred_check
    _
  $region23: #{net_forward.1} parent=0 // pred_check_branch
    %23 = sbr.rel (0) target = $region25
  $region24: #{net_forward.1} parent=0 // pred_region
    _
  $region25: #{net_forward.1} parent=0 // pred_fallthru
    _
  // Predicated region
  $region26: #{net_forward.1} parent=0 // pred_check
    _
  $region27: #{net_forward.1} parent=0 // pred_check_branch
    %25 = sbr.rel (0) target = $region29
  $region28: #{net_forward.1} parent=0 // pred_region
    _
  $region29: #{net_forward.1} parent=0 // pred_fallthru
    _
  %v27 = vld [vmem:[%s0] sm:$0xff]
  %v28 = vpack.c.bf16 %v27, %v27
  %v29 = vld [vmem:[%s1] sm:$0xf]
  %v30 = vld [vmem:[%s1 + $0x4] sm:$0xf]
  %v31 = vld [vmem:[%s2] sm:$0x1]
  %v33 = vlaneseq
  %v34 = vshrl.u32 %v33, 7
  %v35 = vsub.s32 0, %v34
  %v36 = vrot.slane %v31, %v35
  %v40 = vunpack.c.l.b16 %v29
  %v41 = vunpack.c.l.b16 %v30
  %v42 = vpack.c.b16 %v41, %v40
  %vm43 = vcmask 121856
  %v45 = vsel %vm43, %v28, 0
  %vm47 = vcmask 1046528
  %vm48 = vcmask 1047552
  %v49 = vsel %vm47, 4294967295, 65535
  %v50 = vsel %vm48, %v49, 0
  %v52 = vand.u32 %v42, %v50
  %54 = vmatprep.subr.bf16.mxu0 0
  %55 = vmatpush1.bf16.msra.mxu0 %v52
  %56 = vmatprep.subr.bf16.mxu0 0
  %57 = vmatpush1.bf16.msra.mxu0 0
  %58 = vmatprep.subr.bf16.mxu0 0
  %59 = vmatpush1.bf16.msra.mxu0 0
  %60 = vmatprep.subr.bf16.mxu0 0
  %61 = vmatpush1.bf16.msra.mxu0 0
  %62 = vmatprep.subr.bf16.mxu0 0
  %63 = vmatpush1.bf16.msra.mxu0 0
  %64 = vmatprep.subr.bf16.mxu0 0
  %65 = vmatpush1.bf16.msra.mxu0 0
  %66 = vmatprep.subr.bf16.mxu0 0
  %67 = vmatpush1.bf16.msra.mxu0 0
  %68 = vmatprep.subr.bf16.mxu0 0
  %69 = vmatpush1.bf16.msra.mxu0 0
  %70 = vmatprep.subr.bf16.mxu0 0
  %71 = vmatpush1.bf16.msra.mxu0 0
  %72 = vmatprep.subr.bf16.mxu0 0
  %73 = vmatpush1.bf16.msra.mxu0 0
  %74 = vmatprep.subr.bf16.mxu0 0
  %75 = vmatpush1.bf16.msra.mxu0 0
  %76 = vmatprep.subr.bf16.mxu0 0
  %77 = vmatpush1.bf16.msra.mxu0 0
  %78 = vmatprep.subr.bf16.mxu0 0
  %79 = vmatpush1.bf16.msra.mxu0 0
  %80 = vmatprep.subr.bf16.mxu0 0
  %81 = vmatpush1.bf16.msra.mxu0 0
  %82 = vmatprep.subr.bf16.mxu0 0
  %83 = vmatpush1.bf16.msra.mxu0 0
  %84 = vmatprep.subr.bf16.mxu0 0
  %85 = vmatpush1.bf16.msra.mxu0 0
  %86 = vmatprep.mubr.bf16.mxu0 0
  %87 = vmatmul.mubr.bf16.gmra.mrb[0].mxu0 %v45
  %v88 = vpop.f32.mrb[0].mxu0
  %v89 = vadd.f32 %v36, %v88
  %v90 = vpop.f32.mrb[0].mxu0
  %v91 = vpop.f32.mrb[0].mxu0
  %v92 = vpop.f32.mrb[0].mxu0
  %93 = vdwg.mxu0
  %v94 = vxor.u32 %v89, 2147483648
  %v95 = vmul.f32 %v94, 1.442695
  %v96 = vpow.pop %v95
  %v97 = vadd.f32 %v96, 1.0
  %v98 = vrcp.pop %v97
  %v99 = vmul.f32 1.0, %v98
  %v100 = vpack.c.bf16 %v99, %v99
  %v101 = vld [vmem:[%s3] sm:$0xf]
  %v102 = vld [vmem:[%s4] sm:$0x1]
  %v104 = vlaneseq
  %v105 = vshrl.u32 %v104, 7
  %v106 = vsub.s32 0, %v105
  %v107 = vrot.slane %v102, %v106
  %vm109 = vcmask 64512
  %v111 = vsel %vm109, %v100, 0
  %vm113 = vcmask 1043456
  %v115 = vsel %vm113, %v101, 0
  %117 = vmatprep.subr.bf16.mxu0 0
  %118 = vmatpush1.bf16.msra.mxu0 %v115
  %119 = vmatprep.subr.bf16.mxu0 0
  %120 = vmatpush1.bf16.msra.mxu0 0
  %121 = vmatprep.subr.bf16.mxu0 0
  %122 = vmatpush1.bf16.msra.mxu0 0
  %123 = vmatprep.subr.bf16.mxu0 0
  %124 = vmatpush1.bf16.msra.mxu0 0
  %125 = vmatprep.subr.bf16.mxu0 0
  %126 = vmatpush1.bf16.msra.mxu0 0
  %127 = vmatprep.subr.bf16.mxu0 0
  %128 = vmatpush1.bf16.msra.mxu0 0
  %129 = vmatprep.subr.bf16.mxu0 0
  %130 = vmatpush1.bf16.msra.mxu0 0
  %131 = vmatprep.subr.bf16.mxu0 0
  %132 = vmatpush1.bf16.msra.mxu0 0
  %133 = vmatprep.subr.bf16.mxu0 0
  %134 = vmatpush1.bf16.msra.mxu0 0
  %135 = vmatprep.subr.bf16.mxu0 0
  %136 = vmatpush1.bf16.msra.mxu0 0
  %137 = vmatprep.subr.bf16.mxu0 0
  %138 = vmatpush1.bf16.msra.mxu0 0
  %139 = vmatprep.subr.bf16.mxu0 0
  %140 = vmatpush1.bf16.msra.mxu0 0
  %141 = vmatprep.subr.bf16.mxu0 0
  %142 = vmatpush1.bf16.msra.mxu0 0
  %143 = vmatprep.subr.bf16.mxu0 0
  %144 = vmatpush1.bf16.msra.mxu0 0
  %145 = vmatprep.subr.bf16.mxu0 0
  %146 = vmatpush1.bf16.msra.mxu0 0
  %147 = vmatprep.subr.bf16.mxu0 0
  %148 = vmatpush1.bf16.msra.mxu0 0
  %149 = vmatprep.mubr.bf16.mxu0 0
  %150 = vmatmul.mubr.bf16.gmra.mrb[0].mxu0 %v111
  %v151 = vpop.f32.mrb[0].mxu0
  %v152 = vadd.f32 %v107, %v151
  %v153 = vpop.f32.mrb[0].mxu0
  %v154 = vpop.f32.mrb[0].mxu0
  %v155 = vpop.f32.mrb[0].mxu0
  %156 = vdwg.mxu0
  %v157 = vxor.u32 %v152, 2147483648
  %v158 = vmul.f32 %v157, 1.442695
  %v159 = vpow.pop %v158
  %v160 = vadd.f32 %v159, 1.0
  %v161 = vrcp.pop %v160
  %v162 = vmul.f32 1.0, %v161
  %v163 = vpack.c.bf16 %v162, %v162
  %v164 = vld [vmem:[%s5] sm:$0xf]
  %v165 = vld [vmem:[%s6] sm:$0x1]
  %v167 = vlaneseq
  %v168 = vshrl.u32 %v167, 7
  %v169 = vsub.s32 0, %v168
  %v170 = vrot.slane %v165, %v169
  %v173 = vsel %vm109, %v163, 0
  %v176 = vsel %vm113, %v164, 0
  %178 = vmatprep.subr.bf16.mxu0 0
  %179 = vmatpush1.bf16.msra.mxu0 %v176
  %180 = vmatprep.subr.bf16.mxu0 0
  %181 = vmatpush1.bf16.msra.mxu0 0
  %182 = vmatprep.subr.bf16.mxu0 0
  %183 = vmatpush1.bf16.msra.mxu0 0
  %184 = vmatprep.subr.bf16.mxu0 0
  %185 = vmatpush1.bf16.msra.mxu0 0
  %186 = vmatprep.subr.bf16.mxu0 0
  %187 = vmatpush1.bf16.msra.mxu0 0
  %188 = vmatprep.subr.bf16.mxu0 0
  %189 = vmatpush1.bf16.msra.mxu0 0
  %190 = vmatprep.subr.bf16.mxu0 0
  %191 = vmatpush1.bf16.msra.mxu0 0
  %192 = vmatprep.subr.bf16.mxu0 0
  %193 = vmatpush1.bf16.msra.mxu0 0
  %194 = vmatprep.subr.bf16.mxu0 0
  %195 = vmatpush1.bf16.msra.mxu0 0
  %196 = vmatprep.subr.bf16.mxu0 0
  %197 = vmatpush1.bf16.msra.mxu0 0
  %198 = vmatprep.subr.bf16.mxu0 0
  %199 = vmatpush1.bf16.msra.mxu0 0
  %200 = vmatprep.subr.bf16.mxu0 0
  %201 = vmatpush1.bf16.msra.mxu0 0
  %202 = vmatprep.subr.bf16.mxu0 0
  %203 = vmatpush1.bf16.msra.mxu0 0
  %204 = vmatprep.subr.bf16.mxu0 0
  %205 = vmatpush1.bf16.msra.mxu0 0
  %206 = vmatprep.subr.bf16.mxu0 0
  %207 = vmatpush1.bf16.msra.mxu0 0
  %208 = vmatprep.subr.bf16.mxu0 0
  %209 = vmatpush1.bf16.msra.mxu0 0
  %210 = vmatprep.mubr.bf16.mxu0 0
  %211 = vmatmul.mubr.bf16.gmra.mrb[0].mxu0 %v173
  %v212 = vpop.f32.mrb[0].mxu0
  %v213 = vadd.f32 %v170, %v212
  %v214 = vpop.f32.mrb[0].mxu0
  %v215 = vpop.f32.mrb[0].mxu0
  %v216 = vpop.f32.mrb[0].mxu0
  %217 = vdwg.mxu0
  %vm218 = vcmask 31744
  %v219 = vsel %vm218, %v213, -inf
  %220 = vmax.xlane.f32.xlu0 %v219
  %v221 = vpop.xlane.xlu0 %220
  %v222 = vsub.f32 %v213, %v221
  %v223 = vmul.f32 %v222, 1.442695
  %v224 = vpow.pop %v223
  %v225 = vsel %vm218, %v224, 0.0
  %226 = vadd.xlane.f32.xlu0 %v225
  %v227 = vpop.xlane.xlu0 %226
  %v228 = vlog2.pop %v227
  %v229 = vmul.f32 %v228, 0.6931472
  %v230 = vsub.f32 %v222, %v229
  %231 = vst.msk [vmem:[%s7] sm:$0xff] %vm218, %v230
  // Predicated region
  $region30: #{net_forward.1} parent=0 // pred_check
    _
  $region31: #{net_forward.1} parent=0 // pred_check_branch
    %233 = sbr.rel (0) target = $region33
  $region32: #{net_forward.1} parent=0 // pred_region
    _
  $region33: #{net_forward.1} parent=0 // pred_fallthru
    _
  // Predicated region
  $region34: #{net_forward.1} parent=0 // pred_check
    _
  $region35: #{net_forward.1} parent=0 // pred_check_branch
    %235 = sbr.rel (0) target = $region37
  $region36: #{net_forward.1} parent=0 // pred_region
    _
  $region37: #{net_forward.1} parent=0 // pred_fallthru
    _

</llo_original>
